<compile_context>
chip_gen: v6e
topology: v6e:2x2x1
jax: 0.10.0
libtpu: 0.0.40
codegen_flags: <defaults>
</compile_context>

<pallas_src>
import functools
import math

import jax
import jax.numpy as jnp
from jax import lax
from jax.experimental import pallas as pl
from jax.experimental.pallas import tpu as pltpu


_PACKED_DTYPES = (jnp.dtype(jnp.bfloat16), jnp.dtype(jnp.float16),
                  jnp.dtype(jnp.int8), jnp.dtype(jnp.uint8),
                  jnp.dtype(jnp.int16), jnp.dtype(jnp.uint16))


# ---------------------------------------------------------------------------
# 16-bit monotone key helpers (packed single-reduction path)
# ---------------------------------------------------------------------------
def _to_key16(x):
    """x -> int32 key in [0, 0xFFFF], monotone in the dtype's ordering."""
    dt = jnp.dtype(x.dtype)
    if dt in (jnp.dtype(jnp.bfloat16), jnp.dtype(jnp.float16)):
        bits = pltpu.bitcast(x, jnp.int16).astype(jnp.int32)   # sign-extended
        ub = bits & 0xFFFF                                      # raw 16-bit pattern
        # negative floats: larger pattern == more negative -> invert;
        # non-negative floats: shift above all negatives.
        return jnp.where(ub >= 0x8000, 0xFFFF - ub, ub + 0x8000)
    if dt == jnp.dtype(jnp.int8):
        return x.astype(jnp.int32) + 128
    if dt == jnp.dtype(jnp.uint8):
        return x.astype(jnp.int32)
    if dt == jnp.dtype(jnp.int16):
        return x.astype(jnp.int32) + 32768
    if dt == jnp.dtype(jnp.uint16):
        return x.astype(jnp.int32)
    raise NotImplementedError(f"packed key for {dt}")


def _from_key16(key, dtype):
    """Inverse of _to_key16 (exact round trip)."""
    dt = jnp.dtype(dtype)
    if dt in (jnp.dtype(jnp.bfloat16), jnp.dtype(jnp.float16)):
        ub = jnp.where(key >= 0x8000, key - 0x8000, 0xFFFF - key)
        bits = jnp.where(ub >= 0x8000, ub - 0x10000, ub).astype(jnp.int16)
        return pltpu.bitcast(bits, dt)
    if dt == jnp.dtype(jnp.int8):
        return (key - 128).astype(jnp.int8)
    if dt == jnp.dtype(jnp.uint8):
        return key.astype(jnp.uint8)
    if dt == jnp.dtype(jnp.int16):
        return (key - 32768).astype(jnp.int16)
    if dt == jnp.dtype(jnp.uint16):
        return key.astype(jnp.uint16)
    raise NotImplementedError(f"packed value for {dt}")


# ---------------------------------------------------------------------------
# Kernel
# ---------------------------------------------------------------------------
def _topk_kernel(x_ref, vals_ref, idx_ref, *, k: int, largest: bool,
                 packed: bool, kpad: int):
    """Per-tile top-k along the last (lane) axis.

    x_ref:    (ROW_TILE, N)     input tile
    vals_ref: (ROW_TILE, KPAD)  top-k values (lane-dense; only [:, :k] valid)
    idx_ref:  (ROW_TILE, KPAD)  top-k indices (int32; only [:, :k] valid)
    """
    x = x_ref[...]
    tr, n = x.shape
    col = lax.broadcasted_iota(jnp.int32, (tr, n), 1)

    if packed:
        # --- single-XLU-reduction path for <=16-bit dtypes -------------------
        key = _to_key16(x)
        if not largest:
            key = 0xFFFF - key
        # pack: high 16 bits = order key (shifted into signed range),
        #       low 16 bits  = bit-inverted column -> one max() also tie-breaks
        #       to the smallest index.  `col` is dead after this line.
        work = (key - 0x8000) * 65536 + (0xFFFF - col)
        sentinel = jnp.int32(-(2 ** 31))        # < any packed value (n <= 65535)
        key_cols, idx_cols = [], []
        for _ in range(k):                      # static -> fully unrolled
            pmax = jnp.max(work, axis=-1, keepdims=True)   # single reduction
            idx_cols.append(0xFFFF - (pmax & 0xFFFF))
            kk = (pmax >> 16) + 0x8000
            if not largest:
                kk = 0xFFFF - kk
            key_cols.append(kk)
            # packed keys are unique per row -> masks exactly the winning lane
            # without re-streaming the column iota.
            work = jnp.where(work == pmax, sentinel, work)
        if kpad > k:
            key_cols.append(jnp.zeros((tr, kpad - k), jnp.int32))
            idx_cols.append(jnp.zeros((tr, kpad - k), jnp.int32))
        # Single lane-dense store per output (no per-round accumulator RMW).
        vals_ref[...] = _from_key16(jnp.concatenate(key_cols, axis=-1),
                                    vals_ref.dtype)
        idx_ref[...] = jnp.concatenate(idx_cols, axis=-1)
        return

    # --- general path (f32 / int32 / uint32): 2 reductions per round --------
    dt = jnp.dtype(x.dtype)
    is_int = jnp.issubdtype(dt, jnp.integer)
    is_uint32 = dt == jnp.dtype(jnp.uint32)
    if is_int:
        if is_uint32:
            # flip the sign bit -> monotone signed int32 key
            key = pltpu.bitcast(x, jnp.int32) ^ jnp.int32(-(2 ** 31))
        else:
            key = x.astype(jnp.int32)
        work = key if largest else ~key          # bitwise-not: no INT_MIN overflow
        sentinel = jnp.int32(-(2 ** 31))
    else:
        work = x.astype(jnp.float32)
        if not largest:
            work = -work
        # TODO(synk): NaNs get torch's "NaN is largest" ordering, but a selected
        # NaN element's returned value is +/-inf rather than NaN.
        work = jnp.where(jnp.isnan(work),
                         jnp.float32(jnp.inf if largest else -jnp.inf), work)
        sentinel = jnp.float32(-jnp.inf)

    key_cols, idx_cols = [], []
    for _ in range(k):                           # static -> fully unrolled
        m = jnp.max(work, axis=-1, keepdims=True)
        # tie-break: smallest index among the maxima
        idx = jnp.min(jnp.where(work == m, col, n), axis=-1, keepdims=True)
        key_cols.append(m)
        idx_cols.append(idx)
        work = jnp.where(col == idx, sentinel, work)

    if kpad > k:
        key_cols.append(jnp.zeros((tr, kpad - k), work.dtype))
        idx_cols.append(jnp.zeros((tr, kpad - k), jnp.int32))
    keys = jnp.concatenate(key_cols, axis=-1)    # key-domain values
    if is_int:
        v = keys if largest else ~keys
        if is_uint32:
            v = pltpu.bitcast(v ^ jnp.int32(-(2 ** 31)), jnp.uint32)
        vals_ref[...] = v.astype(vals_ref.dtype)
    else:
        vals_ref[...] = (keys if largest else -keys).astype(vals_ref.dtype)
    idx_ref[...] = jnp.concatenate(idx_cols, axis=-1)


# ---------------------------------------------------------------------------
# Wrapper
# ---------------------------------------------------------------------------
def _hw_params():
    """Generation-derived VMEM budgets / TensorCore count."""
    kind = ""
    try:
        kind = jax.devices()[0].device_kind.lower()
    except Exception:
        pass
    vmem_bytes = None
    try:
        vmem_bytes = int(getattr(pltpu.get_tpu_info(),
                                 "vmem_capacity_bytes", 0)) or None
    except Exception:
        pass
    one_tc_big_vmem = any(t in kind for t in
                          ("v5e", "v5 lite", "v5lite", "v6e", "v6 lite", "v6lite", "v6"))
    if one_tc_big_vmem or (vmem_bytes is not None and vmem_bytes >= (100 << 20)):
        # v5e / v6e class: 128 MiB physical VMEM, single TensorCore per chip.
        return {"in_budget": 24 << 20, "vmem_cap": 96 << 20, "num_tc": 1}
    # v7x class (and safe fallback): 64 MiB VMEM per TC, 2 TensorCores per chip.
    return {"in_budget": 6 << 20, "vmem_cap": 44 << 20, "num_tc": 2}


def _choose_row_tile(rows: int, n: int, itemsize: int, hw) -> int:
    # sublane granularity per dtype packing (f32: 8, bf16/f16: 16, int8: 32)
    if itemsize >= 4:
        gran = 8
    elif itemsize == 2:
        gran = 16
    else:
        gran = 32
    rows_ceil = -(-rows // gran) * gran
    # Double-buffered input block must fit this generation's input budget.
    max_by_vmem = max(gran, hw["in_budget"] // max(1, 2 * n * itemsize))
    tile = min(1024, rows_ceil, max_by_vmem)
    tile = max(gran, (tile // gran) * gran)
    # On 2-TC chips (v7x) aim for >= 4 grid steps so both TensorCores stay
    # load-balanced; on 1-TC parts a forced split only adds per-step overhead.
    if hw["num_tc"] >= 2:
        while tile > gran and pl.cdiv(rows_ceil, tile) < 4:
            tile = max(gran, ((tile // 2) // gran) * gran)
    return tile


def onnx_topk(x, k, dim: int = -1, largest: bool = True, sorted_: bool = True):
    """Pallas equivalent of OnnxTopK.forward -> (values, indices)."""
    # ONNX passes k either as a python int or as a 1-element tensor; it must be
    # concrete at trace time since it determines output shapes.
    if isinstance(k, jax.Array):
        k = int(k[0])
    else:
        k = int(k)

    ndim = x.ndim
    dim = dim % ndim

    # Move the top-k axis last and flatten leading dims to rows.
    x_moved = jnp.moveaxis(x, dim, -1)
    lead_shape = x_moved.shape[:-1]
    n = x_moved.shape[-1]
    if k > n:
        raise ValueError(f"TopK: k={k} must be <= reduced dimension size {n}")
    rows = math.prod(lead_shape) if lead_shape else 1
    x2 = x_moved.reshape(rows, n)

    itemsize = jnp.dtype(x2.dtype).itemsize
    hw = _hw_params()
    tile = _choose_row_tile(rows, n, itemsize, hw)

    # Lane-dense output: pad k up to a multiple of 128 so the per-tile output
    # store is a full, unmasked vector store; slice back to k afterwards.
    kpad = -(-k // 128) * 128

    # Packed single-reduction path for <=16-bit dtypes (index must fit 16 bits
    # and the packed minimum must stay above the sentinel -> n <= 65535).
    packed = jnp.dtype(x2.dtype) in _PACKED_DTYPES and n <= 65535

    # Explicit VMEM limit with headroom (scoped defaults are 16/32 MiB).
    in_block = tile * n * itemsize
    tmp_bytes = (2 if packed else 3) * tile * n * 4   # work (+ col iota) + temps
    out_bytes = 2 * 2 * tile * kpad * 4               # two outputs, double-buffered
    vmem_limit = int(min(hw["vmem_cap"],
                         max(32 << 20,
                             2 * in_block + tmp_bytes + out_bytes + (4 << 20))))

    kernel = functools.partial(_topk_kernel, k=k, largest=bool(largest),
                               packed=packed, kpad=kpad)
    # No wrapper-side row padding: rows are independent; Pallas pads the ragged
    # last block's reads and masks its writes.
    # TODO(synk): for large k (>= ~32) over vocab-sized N, switch to a chunked
    # running top-k merge over an "arbitrary" N grid axis instead of streaming
    # the whole (tile, N) block k times.
    vals2, idxs2 = pl.pallas_call(
        kernel,
        out_shape=(
            jax.ShapeDtypeStruct((rows, kpad), x.dtype),
            jax.ShapeDtypeStruct((rows, kpad), jnp.int32),
        ),
        grid=(pl.cdiv(rows, tile),),
        in_specs=[pl.BlockSpec((tile, n), lambda i: (i, 0))],
        out_specs=(
            pl.BlockSpec((tile, kpad), lambda i: (i, 0)),
            pl.BlockSpec((tile, kpad), lambda i: (i, 0)),
        ),
        compiler_params=pltpu.CompilerParams(
            dimension_semantics=("parallel",),
            vmem_limit_bytes=vmem_limit,
        ),
    )(x2)

    vals = vals2[:, :k].reshape(lead_shape + (k,))
    idxs = idxs2[:, :k].reshape(lead_shape + (k,))
    vals = jnp.moveaxis(vals, -1, dim)
    idxs = jnp.moveaxis(idxs, -1, dim)
    # The kernel always emits values in sorted order; for sorted_=False any
    # order is valid per ONNX/torch semantics, so this is still correct.
    # TODO(synk): torch.topk returns int64 indices; we return int32 (JAX x64 off).
    return vals, idxs


if __name__ == "__main__":
    key = jax.random.PRNGKey(0)
    x = jax.random.normal(key, (2, 4, 16, 16), dtype=jnp.float32)
    k = jnp.array([5], dtype=jnp.int32)

    # Module config: dim=-1, largest=1, sorted_=1  (f32 -> general path)
    vals, idxs = onnx_topk(x, k, dim=-1, largest=True, sorted_=True)
    vals, idxs = jax.block_until_ready((vals, idxs))

    ref_vals, ref_idxs = jax.lax.top_k(x, 5)
    assert vals.shape == (2, 4, 16, 5) and idxs.shape == (2, 4, 16, 5)
    assert vals.dtype == x.dtype and idxs.dtype == jnp.int32
    assert jnp.allclose(vals, ref_vals), "values mismatch (f32 path)"
    gathered = jnp.take_along_axis(x, idxs, axis=-1)
    assert jnp.allclose(gathered, vals), "indices do not gather to values (f32)"

    # Smallest-k along a non-last axis (exercises axis move + largest=False).
    vals_s, idxs_s = onnx_topk(x, 3, dim=1, largest=False)
    vals_s, idxs_s = jax.block_until_ready((vals_s, idxs_s))
    ref_s = -jax.lax.top_k(-jnp.moveaxis(x, 1, -1), 3)[0]
    assert jnp.allclose(jnp.moveaxis(vals_s, 1, -1), ref_s), "smallest-k mismatch"
    g_s = jnp.take_along_axis(x, idxs_s, axis=1)
    assert jnp.allclose(g_s, vals_s), "smallest-k indices do not gather to values"

    # bf16 input exercises the packed single-reduction path.
    xb = x.astype(jnp.bfloat16)
    vb, ib = onnx_topk(xb, 5, dim=-1, largest=True)
    vb, ib = jax.block_until_ready((vb, ib))
    ref_vb, _ = jax.lax.top_k(xb, 5)
    assert jnp.array_equal(vb, ref_vb), "values mismatch (bf16 packed path)"
    gb = jnp.take_along_axis(xb, ib, axis=-1)
    assert jnp.array_equal(gb, vb), "indices do not gather to values (bf16)"

    # int8 input exercises the extended integer packed path.
    xi = jax.random.randint(jax.random.PRNGKey(1), (32, 64), -100, 100,
                            dtype=jnp.int32).astype(jnp.int8)
    vi, ii = onnx_topk(xi, 7, dim=-1, largest=True)
    vi, ii = jax.block_until_ready((vi, ii))
    ref_vi, _ = jax.lax.top_k(xi.astype(jnp.int32), 7)
    assert jnp.array_equal(vi.astype(jnp.int32), ref_vi), "values mismatch (int8)"
    gi = jnp.take_along_axis(xi, ii, axis=-1)
    assert jnp.array_equal(gi, vi), "indices do not gather to values (int8)"

    print("KERNEL_OK")
</pallas_src>

<mosaic_0001>
module attributes {stable_mosaic.version = 11 : i64} {
  func.func @_topk_kernel(%arg0: i32, %arg1: memref<32x16xf32, #tpu.memory_space<vmem>>, %arg2: memref<32x128xf32, #tpu.memory_space<vmem>>, %arg3: memref<32x128xi32, #tpu.memory_space<vmem>>) attributes {dimension_semantics = [#tpu.dimension_semantics<parallel>], iteration_bounds = array<i64: 4>, scalar_prefetch = 0 : i64, scratch_operands = 0 : i64, tpu.core_type = #tpu.core_type<tc>, window_params = [{transform_indices = @transform_0, window_bounds = array<i64: 32, 16>}, {transform_indices = @transform_1, window_bounds = array<i64: 32, 128>}, {transform_indices = @transform_2, window_bounds = array<i64: 32, 128>}]} {
    %c0 = arith.constant 0 : index
    %c0_0 = arith.constant 0 : index
    %0 = vector.load %arg1[%c0, %c0_0] : memref<32x16xf32, #tpu.memory_space<vmem>>, vector<32x16xf32>
    %1 = tpu.iota {dimensions = array<i32: 1>} : vector<32x16xi32>
    %2 = arith.cmpf one, %0, %0 : vector<32x16xf32>
    %cst = arith.constant 0x7F800000 : f32
    %3 = vector.broadcast %cst : f32 to vector<32x16xf32>
    %4 = arith.select %2, %3, %0 : vector<32x16xi1>, vector<32x16xf32>
    %cst_1 = arith.constant dense<0xFF800000> : vector<32xf32>
    %5 = vector.multi_reduction <maximumf>, %4, %cst_1 [1] : vector<32x16xf32> to vector<32xf32>
    %6 = vector.shape_cast %5 : vector<32xf32> to vector<32x1xf32>
    %7 = vector.broadcast %6 : vector<32x1xf32> to vector<32x16xf32>
    %8 = arith.cmpf oeq, %4, %7 : vector<32x16xf32>
    %c16_i32 = arith.constant 16 : i32
    %9 = vector.broadcast %c16_i32 : i32 to vector<32x16xi32>
    %10 = arith.select %8, %1, %9 : vector<32x16xi1>, vector<32x16xi32>
    %cst_2 = arith.constant dense<2147483647> : vector<32xi32>
    %11 = vector.multi_reduction <minsi>, %10, %cst_2 [1] : vector<32x16xi32> to vector<32xi32>
    %12 = vector.shape_cast %11 : vector<32xi32> to vector<32x1xi32>
    %13 = vector.broadcast %12 : vector<32x1xi32> to vector<32x16xi32>
    %14 = arith.cmpi eq, %1, %13 : vector<32x16xi32>
    %cst_3 = arith.constant 0xFF800000 : f32
    %15 = vector.broadcast %cst_3 : f32 to vector<32x16xf32>
    %16 = arith.select %14, %15, %4 : vector<32x16xi1>, vector<32x16xf32>
    %cst_4 = arith.constant dense<0xFF800000> : vector<32xf32>
    %17 = vector.multi_reduction <maximumf>, %16, %cst_4 [1] : vector<32x16xf32> to vector<32xf32>
    %18 = vector.shape_cast %17 : vector<32xf32> to vector<32x1xf32>
    %19 = vector.broadcast %18 : vector<32x1xf32> to vector<32x16xf32>
    %20 = arith.cmpf oeq, %16, %19 : vector<32x16xf32>
    %c16_i32_5 = arith.constant 16 : i32
    %21 = vector.broadcast %c16_i32_5 : i32 to vector<32x16xi32>
    %22 = arith.select %20, %1, %21 : vector<32x16xi1>, vector<32x16xi32>
    %cst_6 = arith.constant dense<2147483647> : vector<32xi32>
    %23 = vector.multi_reduction <minsi>, %22, %cst_6 [1] : vector<32x16xi32> to vector<32xi32>
    %24 = vector.shape_cast %23 : vector<32xi32> to vector<32x1xi32>
    %25 = vector.broadcast %24 : vector<32x1xi32> to vector<32x16xi32>
    %26 = arith.cmpi eq, %1, %25 : vector<32x16xi32>
    %cst_7 = arith.constant 0xFF800000 : f32
    %27 = vector.broadcast %cst_7 : f32 to vector<32x16xf32>
    %28 = arith.select %26, %27, %16 : vector<32x16xi1>, vector<32x16xf32>
    %cst_8 = arith.constant dense<0xFF800000> : vector<32xf32>
    %29 = vector.multi_reduction <maximumf>, %28, %cst_8 [1] : vector<32x16xf32> to vector<32xf32>
    %30 = vector.shape_cast %29 : vector<32xf32> to vector<32x1xf32>
    %31 = vector.broadcast %30 : vector<32x1xf32> to vector<32x16xf32>
    %32 = arith.cmpf oeq, %28, %31 : vector<32x16xf32>
    %c16_i32_9 = arith.constant 16 : i32
    %33 = vector.broadcast %c16_i32_9 : i32 to vector<32x16xi32>
    %34 = arith.select %32, %1, %33 : vector<32x16xi1>, vector<32x16xi32>
    %cst_10 = arith.constant dense<2147483647> : vector<32xi32>
    %35 = vector.multi_reduction <minsi>, %34, %cst_10 [1] : vector<32x16xi32> to vector<32xi32>
    %36 = vector.shape_cast %35 : vector<32xi32> to vector<32x1xi32>
    %37 = vector.broadcast %36 : vector<32x1xi32> to vector<32x16xi32>
    %38 = arith.cmpi eq, %1, %37 : vector<32x16xi32>
    %cst_11 = arith.constant 0xFF800000 : f32
    %39 = vector.broadcast %cst_11 : f32 to vector<32x16xf32>
    %40 = arith.select %38, %39, %28 : vector<32x16xi1>, vector<32x16xf32>
    %cst_12 = arith.constant dense<0xFF800000> : vector<32xf32>
    %41 = vector.multi_reduction <maximumf>, %40, %cst_12 [1] : vector<32x16xf32> to vector<32xf32>
    %42 = vector.shape_cast %41 : vector<32xf32> to vector<32x1xf32>
    %43 = vector.broadcast %42 : vector<32x1xf32> to vector<32x16xf32>
    %44 = arith.cmpf oeq, %40, %43 : vector<32x16xf32>
    %c16_i32_13 = arith.constant 16 : i32
    %45 = vector.broadcast %c16_i32_13 : i32 to vector<32x16xi32>
    %46 = arith.select %44, %1, %45 : vector<32x16xi1>, vector<32x16xi32>
    %cst_14 = arith.constant dense<2147483647> : vector<32xi32>
    %47 = vector.multi_reduction <minsi>, %46, %cst_14 [1] : vector<32x16xi32> to vector<32xi32>
    %48 = vector.shape_cast %47 : vector<32xi32> to vector<32x1xi32>
    %49 = vector.broadcast %48 : vector<32x1xi32> to vector<32x16xi32>
    %50 = arith.cmpi eq, %1, %49 : vector<32x16xi32>
    %cst_15 = arith.constant 0xFF800000 : f32
    %51 = vector.broadcast %cst_15 : f32 to vector<32x16xf32>
    %52 = arith.select %50, %51, %40 : vector<32x16xi1>, vector<32x16xf32>
    %cst_16 = arith.constant dense<0xFF800000> : vector<32xf32>
    %53 = vector.multi_reduction <maximumf>, %52, %cst_16 [1] : vector<32x16xf32> to vector<32xf32>
    %54 = vector.shape_cast %53 : vector<32xf32> to vector<32x1xf32>
    %55 = vector.broadcast %54 : vector<32x1xf32> to vector<32x16xf32>
    %56 = arith.cmpf oeq, %52, %55 : vector<32x16xf32>
    %c16_i32_17 = arith.constant 16 : i32
    %57 = vector.broadcast %c16_i32_17 : i32 to vector<32x16xi32>
    %58 = arith.select %56, %1, %57 : vector<32x16xi1>, vector<32x16xi32>
    %cst_18 = arith.constant dense<2147483647> : vector<32xi32>
    %59 = vector.multi_reduction <minsi>, %58, %cst_18 [1] : vector<32x16xi32> to vector<32xi32>
    %60 = vector.shape_cast %59 : vector<32xi32> to vector<32x1xi32>
    %cst_19 = arith.constant 0.000000e+00 : f32
    %61 = vector.broadcast %cst_19 : f32 to vector<32x123xf32>
    %c0_i32 = arith.constant 0 : i32
    %62 = vector.broadcast %c0_i32 : i32 to vector<32x123xi32>
    %63 = tpu.concatenate %6, %18, %30, %42, %54, %61 in 1 : vector<32x1xf32>, vector<32x1xf32>, vector<32x1xf32>, vector<32x1xf32>, vector<32x1xf32>, vector<32x123xf32> -> vector<32x128xf32>
    %c0_20 = arith.constant 0 : index
    %c0_21 = arith.constant 0 : index
    %64 = vector.load %arg2[%c0_20, %c0_21] : memref<32x128xf32, #tpu.memory_space<vmem>>, vector<32x128xf32>
    tpu.vector_store %arg2[%c0_20, %c0_21], %63 {strides = array<i32>} : memref<32x128xf32, #tpu.memory_space<vmem>>, vector<32x128xf32>,
    %65 = tpu.concatenate %12, %24, %36, %48, %60, %62 in 1 : vector<32x1xi32>, vector<32x1xi32>, vector<32x1xi32>, vector<32x1xi32>, vector<32x1xi32>, vector<32x123xi32> -> vector<32x128xi32>
    %c0_22 = arith.constant 0 : index
    %c0_23 = arith.constant 0 : index
    %66 = vector.load %arg3[%c0_22, %c0_23] : memref<32x128xi32, #tpu.memory_space<vmem>>, vector<32x128xi32>
    tpu.vector_store %arg3[%c0_22, %c0_23], %65 {strides = array<i32>} : memref<32x128xi32, #tpu.memory_space<vmem>>, vector<32x128xi32>,
    return
  }
  func.func @transform_0(%arg0: i32) -> (i32, i32) {
    %c0_i32 = arith.constant 0 : i32
    %c0_i32_0 = arith.constant 0 : i32
    return %arg0, %c0_i32 : i32, i32
  }
  func.func @transform_1(%arg0: i32) -> (i32, i32) {
    %c0_i32 = arith.constant 0 : i32
    %c0_i32_0 = arith.constant 0 : i32
    return %arg0, %c0_i32 : i32, i32
  }
  func.func @transform_2(%arg0: i32) -> (i32, i32) {
    %c0_i32 = arith.constant 0 : i32
    %c0_i32_0 = arith.constant 0 : i32
    return %arg0, %c0_i32 : i32, i32
  }
}

</mosaic_0001>

<llo_original>
// kernel: tpu_custom_call.1
$region0: #{tpu_custom_call.1}
  #allocation0 [shape = 'u32[]', space=smem, size = 0x4, offset = 0x4, fixed_abs, tag = 'smem constant byte address 0x4 - core index']
  #allocation1 [shape = 'u32[144,128]{1,0:T(1,128)}', space=vmem, size = 0x12000, scoped, tag = 'internal scratch']
  %s0 = inlined_call_operand.vmem [shape: f32[128,16], index: 0, kind: input, shape index: {}]
  %s1 = inlined_call_operand.hbm [shape: f32[128,128], index: 1, kind: output, shape index: {0}]
  %s2 = inlined_call_operand.hbm [shape: s32[128,128], index: 2, kind: output, shape index: {1}]
  %3 = xla_tuple %s1, %s2
  %s4 = sld [smem:[#allocation0]]
  $region45: #{tpu_custom_call.1} parent=0
    _
  %s6 = ssub.s32 1, %s4
  %s7 = scalar_select 0, %s6, %s4
  $region1: #{tpu_custom_call.1} parent=0
    #allocation2 [shape = 'u8[32768]{0}', space=vmem, size = 0x8000, scoped, tag = 'output window, operand 0']
    #allocation3 [shape = 's32[2]{0}', space=sflag, size = 0x8, scoped, tag = 'scoped memory for tpu_custom_call.1']
    #allocation4 [shape = 'u8[32768]{0}', space=vmem, size = 0x8000, scoped, tag = 'output window, operand 1']
    #allocation5 [shape = 's32[2]{0}', space=sflag, size = 0x8, scoped, tag = 'scoped memory for tpu_custom_call.1']
    %8 = vsyncpa [#allocation3], 0
    %s9 = scalar_lea.sflag [#allocation3], 1
    %10 = vsyncpa %s9, 0
    %11 = vsyncpa [#allocation5], 0
    %s12 = scalar_lea.sflag [#allocation5], 1
    %13 = vsyncpa %s12, 0
    loop: start=0, step=1, limit=6
    $region2: #{tpu_custom_call.1} parent=1 // loop_pre_header
      _
    $region3: #{tpu_custom_call.1} parent=1 // loop_header
      %s15 = sphi 0, %s19
      %p16 = scmp.ge.s32.totalorder %s15, 6
      %s25 = sphi 0, %s27
      %s28 = sphi 0, %s25
      %s29 = sphi 0, %s28
      %s45 = sphi 0, %s29
      %s51 = sphi 0, %s53
      %s54 = sphi 0, %s51
      %s55 = sphi 0, %s54
      %s71 = sphi 0, %s55
      %s77 = sphi 0, %s79
      %s80 = sphi 0, %s77
      %s81 = sphi 0, %s80
      %s97 = sphi 0, %s81
    $region4: #{tpu_custom_call.1} parent=1 // loop_header_branch
      %18 = sbr.rel (%p16) target = $region8
    $region5: #{tpu_custom_call.1} parent=1 // loop_body
      %s20 = ssub.s32 %s15, 1
      %s21 = ssub.s32 %s15, 2
      %s22 = sadd.s32 %s15, 1
      %s23 = ssub.s32 %s15, %s22
      %p24 = scmp.eq.s32.totalorder %s23, 0
      %s26 = sadd.s32 %s25, 1
      %s27 = scalar_select %p24, %s25, %s26
      %p30 = pneg %p24
      %p31 = scmp.eq.s32.totalorder %s15, 3
      %p32 = por %p30, %p31
      %p33 = scmp.ne.s32.totalorder %s25, %s28
      %p34 = scmp.eq.s32.totalorder %s15, 0
      %p35 = por %p33, %p34
      %p36 = scmp.ne.s32.totalorder %s25, %s28
      %p37 = scmp.eq.s32.totalorder %s20, 3
      %p38 = por %p36, %p37
      %p39 = scmp.ne.s32.totalorder %s28, %s29
      %p40 = scmp.eq.s32.totalorder %s20, 0
      %p41 = por %p39, %p40
      %p42 = scmp.ne.s32.totalorder %s28, %s29
      %p43 = scmp.eq.s32.totalorder %s21, 3
      %p44 = por %p42, %p43
      %p46 = scmp.ne.s32.totalorder %s29, %s45
      %p47 = scmp.eq.s32.totalorder %s21, 0
      %p48 = por %p46, %p47
      %s49 = ssub.s32 %s15, %s22
      %p50 = scmp.eq.s32.totalorder %s49, 0
      %s52 = sadd.s32 %s51, 1
      %s53 = scalar_select %p50, %s51, %s52
      %p56 = pneg %p50
      %p57 = scmp.eq.s32.totalorder %s15, 3
      %p58 = por %p56, %p57
      %p59 = scmp.ne.s32.totalorder %s51, %s54
      %p60 = scmp.eq.s32.totalorder %s15, 0
      %p61 = por %p59, %p60
      %p62 = scmp.ne.s32.totalorder %s51, %s54
      %p63 = scmp.eq.s32.totalorder %s20, 3
      %p64 = por %p62, %p63
      %p65 = scmp.ne.s32.totalorder %s54, %s55
      %p66 = scmp.eq.s32.totalorder %s20, 0
      %p67 = por %p65, %p66
      %p68 = scmp.ne.s32.totalorder %s54, %s55
      %p69 = scmp.eq.s32.totalorder %s21, 3
      %p70 = por %p68, %p69
      %p72 = scmp.ne.s32.totalorder %s55, %s71
      %p73 = scmp.eq.s32.totalorder %s21, 0
      %p74 = por %p72, %p73
      %s75 = ssub.s32 %s15, %s22
      %p76 = scmp.eq.s32.totalorder %s75, 0
      %s78 = sadd.s32 %s77, 1
      %s79 = scalar_select %p76, %s77, %s78
      %p82 = pneg %p76
      %p83 = scmp.eq.s32.totalorder %s15, 3
      %p84 = por %p82, %p83
      %p85 = scmp.ne.s32.totalorder %s77, %s80
      %p86 = scmp.eq.s32.totalorder %s15, 0
      %p87 = por %p85, %p86
      %p88 = scmp.ne.s32.totalorder %s77, %s80
      %p89 = scmp.eq.s32.totalorder %s20, 3
      %p90 = por %p88, %p89
      %p91 = scmp.ne.s32.totalorder %s80, %s81
      %p92 = scmp.eq.s32.totalorder %s20, 0
      %p93 = por %p91, %p92
      %p94 = scmp.ne.s32.totalorder %s80, %s81
      %p95 = scmp.eq.s32.totalorder %s21, 3
      %p96 = por %p94, %p95
      %p98 = scmp.ne.s32.totalorder %s81, %s97
      %p99 = scmp.eq.s32.totalorder %s21, 0
      %p100 = por %p98, %p99
      %p101 = scmp.le.s32.totalorder 1, %s15
      %p102 = scmp.lt.s32.totalorder %s15, 5
      %p103 = pnand %p101, %p102
      %p104 = pneg %p103
      // Predicated region
      $region9: #{tpu_custom_call.1} parent=5 // pred_check
        _
      $region10: #{tpu_custom_call.1} parent=5 // pred_check_branch
        %106 = sbr.rel (%p103) target = $region12
      $region11: #{tpu_custom_call.1} parent=5 // pred_region
        %s107 = ssub.s32 %s15, 1
      $region12: #{tpu_custom_call.1} parent=5 // pred_fallthru
        _
      %p108 = scmp.lt.s32.totalorder %s15, 4
      // Predicated region
      $region13: #{tpu_custom_call.1} parent=5 // pred_check
        %p109 = pneg %p108
      $region14: #{tpu_custom_call.1} parent=5 // pred_check_branch
        %111 = sbr.rel (%p109) target = $region16
      $region15: #{tpu_custom_call.1} parent=5 // pred_region
        // Predicated region
        $region17: #{tpu_custom_call.1} parent=15 // pred_check
          %p112 = pneg %p35
        $region18: #{tpu_custom_call.1} parent=15 // pred_check_branch
          %114 = sbr.rel (%p112) target = $region20
        $region19: #{tpu_custom_call.1} parent=15 // pred_region
          %s115 = smul.u32 4, %s15
          %p116 = scmp.lt.s32.totalorder %s115, 15
          %s117 = scalar_select %p116, %s115, 15
          %s118 = smul.addr %s117, 8
          %s119 = scalar_lea.vmem %s0, %s118
          %s120 = smul.u32 4, %s15
        $region20: #{tpu_custom_call.1} parent=15 // pred_fallthru
          _
      $region16: #{tpu_custom_call.1} parent=5 // pred_fallthru
        _
      %p121 = scmp.le.s32.totalorder 1, %s15
      %p122 = scmp.lt.s32.totalorder %s15, 5
      %p123 = pnand %p121, %p122
      %p124 = pneg %p123
      // Predicated region
      $region21: #{tpu_custom_call.1} parent=5 // pred_check
        _
      $region22: #{tpu_custom_call.1} parent=5 // pred_check_branch
        %126 = sbr.rel (%p123) target = $region24
      $region23: #{tpu_custom_call.1} parent=5 // pred_region
        %s127 = ssub.s32 %s15, 1
        %s128 = smul.u32 4, %s20
        %p129 = scmp.lt.s32.totalorder %s128, 15
        %s130 = scalar_select %p129, %s128, 15
        %s131 = smul.addr %s130, 8
        %s132 = scalar_lea.vmem %s0, %s131
        %p133 = pneg %p41
        %p134 = pneg %p38
        %p135 = pneg %p67
        %p136 = pneg %p64
        %s137 = sand.u32 %s54, 1
        %s138 = scalar_lea.sflag [#allocation3], %s137
        %s139 = sand.u32 %s54, 1
        %s140 = smul.addr %s139, 32
        %s141 = scalar_lea.vmem [#allocation2], %s140
        %p142 = pneg %p93
        %p143 = pneg %p90
        %s144 = sand.u32 %s80, 1
        %s145 = scalar_lea.sflag [#allocation5], %s144
        %s146 = sand.u32 %s80, 1
        %s147 = smul.addr %s146, 32
        %s148 = scalar_lea.vmem [#allocation4], %s147
        %s149 = smul.u32 4, %s20
        %p150 = scmp.lt.s32.totalorder %s149, 15
        %s151 = scalar_select %p150, %s149, 15
        %s152 = smul.addr %s151, 8
        %s153 = scalar_lea.vmem %s0, %s152
        %s154 = smul.u32 4, %s20
        %s155 = smul.u32 4, %s20
        %s156 = smul.u32 4, %s20
        %v157 = vld [vmem:[%s153] sm:$0xff]
        %v158 = vld [vmem:[%s153 + $0x8] sm:$0xff]
        %v159 = vld [vmem:[%s153 + $0x10] sm:$0xff]
        %v160 = vld [vmem:[%s153 + $0x18] sm:$0xff]
        %v161 = vlaneseq
        %v162 = vand.u32 %v161, 127
        %vm163 = vcmp.ne.f32.partialorder %v157, %v157
        %vm164 = vcmp.ne.f32.partialorder %v158, %v158
        %vm165 = vcmp.ne.f32.partialorder %v159, %v159
        %vm166 = vcmp.ne.f32.partialorder %v160, %v160
        %v167 = vsel %vm163, inf, %v157
        %v168 = vsel %vm164, inf, %v158
        %v169 = vsel %vm165, inf, %v159
        %v170 = vsel %vm166, inf, %v160
        %vm171 = vcmask 130048
        %v172 = vsel %vm171, %v167, -inf
        %173 = vmax.xlane.f32.xlu0 %v172
        %v174 = vpop.xlane.xlu0 %173
        %v175 = vsel %vm171, %v168, -inf
        %176 = vmax.xlane.f32.xlu0 %v175
        %v177 = vpop.xlane.xlu0 %176
        %v178 = vsel %vm171, %v169, -inf
        %179 = vmax.xlane.f32.xlu0 %v178
        %v180 = vpop.xlane.xlu0 %179
        %v181 = vsel %vm171, %v170, -inf
        %182 = vmax.xlane.f32.xlu0 %v181
        %v183 = vpop.xlane.xlu0 %182
        %vm184 = vcmp.eq.f32.partialorder %v167, %v174
        %vm185 = vcmp.eq.f32.partialorder %v168, %v177
        %vm186 = vcmp.eq.f32.partialorder %v169, %v180
        %vm187 = vcmp.eq.f32.partialorder %v170, %v183
        %v188 = vsel %vm184, %v162, 16
        %v189 = vsel %vm185, %v162, 16
        %v190 = vsel %vm186, %v162, 16
        %v191 = vsel %vm187, %v162, 16
        %v192 = vsel %vm171, %v188, 2147483647
        %v193 = vand.u32 %v192, 65535
        %v194 = vshra.s32 %v192, 16
        %v195 = vcvt.s32.f32 %v193
        %v196 = vcvt.s32.f32 %v194
        %197 = vmin.xlane.f32.xlu0 %v196
        %v198 = vpop.xlane.xlu0 %197
        %vm199 = vcmp.eq.f32.partialorder %v196, %v198
        %v200 = vsel %vm199, %v195, inf
        %201 = vmin.xlane.f32.xlu0 %v200
        %v202 = vpop.xlane.xlu0 %201
        %v203 = vcvt.f32.s32 %v202
        %v204 = vcvt.f32.s32 %v198
        %v205 = vshll.u32 %v204, 16
        %v206 = vadd.s32 %v205, %v203
        %v207 = vsel %vm171, %v189, 2147483647
        %v208 = vand.u32 %v207, 65535
        %v209 = vshra.s32 %v207, 16
        %v210 = vcvt.s32.f32 %v208
        %v211 = vcvt.s32.f32 %v209
        %212 = vmin.xlane.f32.xlu0 %v211
        %v213 = vpop.xlane.xlu0 %212
        %vm214 = vcmp.eq.f32.partialorder %v211, %v213
        %v215 = vsel %vm214, %v210, inf
        %216 = vmin.xlane.f32.xlu0 %v215
        %v217 = vpop.xlane.xlu0 %216
        %v218 = vcvt.f32.s32 %v217
        %v219 = vcvt.f32.s32 %v213
        %v220 = vshll.u32 %v219, 16
        %v221 = vadd.s32 %v220, %v218
        %v222 = vsel %vm171, %v190, 2147483647
        %v223 = vand.u32 %v222, 65535
        %v224 = vshra.s32 %v222, 16
        %v225 = vcvt.s32.f32 %v223
        %v226 = vcvt.s32.f32 %v224
        %227 = vmin.xlane.f32.xlu0 %v226
        %v228 = vpop.xlane.xlu0 %227
        %vm229 = vcmp.eq.f32.partialorder %v226, %v228
        %v230 = vsel %vm229, %v225, inf
        %231 = vmin.xlane.f32.xlu0 %v230
        %v232 = vpop.xlane.xlu0 %231
        %v233 = vcvt.f32.s32 %v232
        %v234 = vcvt.f32.s32 %v228
        %v235 = vshll.u32 %v234, 16
        %v236 = vadd.s32 %v235, %v233
        %v237 = vsel %vm171, %v191, 2147483647
        %v238 = vand.u32 %v237, 65535
        %v239 = vshra.s32 %v237, 16
        %v240 = vcvt.s32.f32 %v238
        %v241 = vcvt.s32.f32 %v239
        %242 = vmin.xlane.f32.xlu0 %v241
        %v243 = vpop.xlane.xlu0 %242
        %vm244 = vcmp.eq.f32.partialorder %v241, %v243
        %v245 = vsel %vm244, %v240, inf
        %246 = vmin.xlane.f32.xlu0 %v245
        %v247 = vpop.xlane.xlu0 %246
        %v248 = vcvt.f32.s32 %v247
        %v249 = vcvt.f32.s32 %v243
        %v250 = vshll.u32 %v249, 16
        %v251 = vadd.s32 %v250, %v248
        %vm252 = vcmp.eq.s32.totalorder %v162, %v206
        %vm253 = vcmp.eq.s32.totalorder %v162, %v221
        %vm254 = vcmp.eq.s32.totalorder %v162, %v236
        %vm255 = vcmp.eq.s32.totalorder %v162, %v251
        %v256 = vsel %vm252, -inf, %v167
        %v257 = vsel %vm253, -inf, %v168
        %v258 = vsel %vm254, -inf, %v169
        %v259 = vsel %vm255, -inf, %v170
        %v260 = vsel %vm171, %v256, -inf
        %261 = vmax.xlane.f32.xlu0 %v260
        %v262 = vpop.xlane.xlu0 %261
        %v263 = vsel %vm171, %v257, -inf
        %264 = vmax.xlane.f32.xlu0 %v263
        %v265 = vpop.xlane.xlu0 %264
        %v266 = vsel %vm171, %v258, -inf
        %267 = vmax.xlane.f32.xlu0 %v266
        %v268 = vpop.xlane.xlu0 %267
        %v269 = vsel %vm171, %v259, -inf
        %270 = vmax.xlane.f32.xlu0 %v269
        %v271 = vpop.xlane.xlu0 %270
        %vm272 = vcmp.eq.f32.partialorder %v256, %v262
        %vm273 = vcmp.eq.f32.partialorder %v257, %v265
        %vm274 = vcmp.eq.f32.partialorder %v258, %v268
        %vm275 = vcmp.eq.f32.partialorder %v259, %v271
        %v276 = vsel %vm272, %v162, 16
        %v277 = vsel %vm273, %v162, 16
        %v278 = vsel %vm274, %v162, 16
        %v279 = vsel %vm275, %v162, 16
        %v280 = vsel %vm171, %v276, 2147483647
        %v281 = vand.u32 %v280, 65535
        %v282 = vshra.s32 %v280, 16
        %v283 = vcvt.s32.f32 %v281
        %v284 = vcvt.s32.f32 %v282
        %285 = vmin.xlane.f32.xlu0 %v284
        %v286 = vpop.xlane.xlu0 %285
        %vm287 = vcmp.eq.f32.partialorder %v284, %v286
        %v288 = vsel %vm287, %v283, inf
        %289 = vmin.xlane.f32.xlu0 %v288
        %v290 = vpop.xlane.xlu0 %289
        %v291 = vcvt.f32.s32 %v290
        %v292 = vcvt.f32.s32 %v286
        %v293 = vshll.u32 %v292, 16
        %v294 = vadd.s32 %v293, %v291
        %v295 = vsel %vm171, %v277, 2147483647
        %v296 = vand.u32 %v295, 65535
        %v297 = vshra.s32 %v295, 16
        %v298 = vcvt.s32.f32 %v296
        %v299 = vcvt.s32.f32 %v297
        %300 = vmin.xlane.f32.xlu0 %v299
        %v301 = vpop.xlane.xlu0 %300
        %vm302 = vcmp.eq.f32.partialorder %v299, %v301
        %v303 = vsel %vm302, %v298, inf
        %304 = vmin.xlane.f32.xlu0 %v303
        %v305 = vpop.xlane.xlu0 %304
        %v306 = vcvt.f32.s32 %v305
        %v307 = vcvt.f32.s32 %v301
        %v308 = vshll.u32 %v307, 16
        %v309 = vadd.s32 %v308, %v306
        %v310 = vsel %vm171, %v278, 2147483647
        %v311 = vand.u32 %v310, 65535
        %v312 = vshra.s32 %v310, 16
        %v313 = vcvt.s32.f32 %v311
        %v314 = vcvt.s32.f32 %v312
        %315 = vmin.xlane.f32.xlu0 %v314
        %v316 = vpop.xlane.xlu0 %315
        %vm317 = vcmp.eq.f32.partialorder %v314, %v316
        %v318 = vsel %vm317, %v313, inf
        %319 = vmin.xlane.f32.xlu0 %v318
        %v320 = vpop.xlane.xlu0 %319
        %v321 = vcvt.f32.s32 %v320
        %v322 = vcvt.f32.s32 %v316
        %v323 = vshll.u32 %v322, 16
        %v324 = vadd.s32 %v323, %v321
        %v325 = vsel %vm171, %v279, 2147483647
        %v326 = vand.u32 %v325, 65535
        %v327 = vshra.s32 %v325, 16
        %v328 = vcvt.s32.f32 %v326
        %v329 = vcvt.s32.f32 %v327
        %330 = vmin.xlane.f32.xlu0 %v329
        %v331 = vpop.xlane.xlu0 %330
        %vm332 = vcmp.eq.f32.partialorder %v329, %v331
        %v333 = vsel %vm332, %v328, inf
        %334 = vmin.xlane.f32.xlu0 %v333
        %v335 = vpop.xlane.xlu0 %334
        %v336 = vcvt.f32.s32 %v335
        %v337 = vcvt.f32.s32 %v331
        %v338 = vshll.u32 %v337, 16
        %v339 = vadd.s32 %v338, %v336
        %vm340 = vcmp.eq.s32.totalorder %v162, %v294
        %vm341 = vcmp.eq.s32.totalorder %v162, %v309
        %vm342 = vcmp.eq.s32.totalorder %v162, %v324
        %vm343 = vcmp.eq.s32.totalorder %v162, %v339
        %v344 = vsel %vm340, -inf, %v256
        %v345 = vsel %vm341, -inf, %v257
        %v346 = vsel %vm342, -inf, %v258
        %v347 = vsel %vm343, -inf, %v259
        %v348 = vsel %vm171, %v344, -inf
        %349 = vmax.xlane.f32.xlu0 %v348
        %v350 = vpop.xlane.xlu0 %349
        %v351 = vsel %vm171, %v345, -inf
        %352 = vmax.xlane.f32.xlu0 %v351
        %v353 = vpop.xlane.xlu0 %352
        %v354 = vsel %vm171, %v346, -inf
        %355 = vmax.xlane.f32.xlu0 %v354
        %v356 = vpop.xlane.xlu0 %355
        %v357 = vsel %vm171, %v347, -inf
        %358 = vmax.xlane.f32.xlu0 %v357
        %v359 = vpop.xlane.xlu0 %358
        %vm360 = vcmp.eq.f32.partialorder %v344, %v350
        %vm361 = vcmp.eq.f32.partialorder %v345, %v353
        %vm362 = vcmp.eq.f32.partialorder %v346, %v356
        %vm363 = vcmp.eq.f32.partialorder %v347, %v359
        %v364 = vsel %vm360, %v162, 16
        %v365 = vsel %vm361, %v162, 16
        %v366 = vsel %vm362, %v162, 16
        %v367 = vsel %vm363, %v162, 16
        %v368 = vsel %vm171, %v364, 2147483647
        %v369 = vand.u32 %v368, 65535
        %v370 = vshra.s32 %v368, 16
        %v371 = vcvt.s32.f32 %v369
        %v372 = vcvt.s32.f32 %v370
        %373 = vmin.xlane.f32.xlu0 %v372
        %v374 = vpop.xlane.xlu0 %373
        %vm375 = vcmp.eq.f32.partialorder %v372, %v374
        %v376 = vsel %vm375, %v371, inf
        %377 = vmin.xlane.f32.xlu0 %v376
        %v378 = vpop.xlane.xlu0 %377
        %v379 = vcvt.f32.s32 %v378
        %v380 = vcvt.f32.s32 %v374
        %v381 = vshll.u32 %v380, 16
        %v382 = vadd.s32 %v381, %v379
        %v383 = vsel %vm171, %v365, 2147483647
        %v384 = vand.u32 %v383, 65535
        %v385 = vshra.s32 %v383, 16
        %v386 = vcvt.s32.f32 %v384
        %v387 = vcvt.s32.f32 %v385
        %388 = vmin.xlane.f32.xlu0 %v387
        %v389 = vpop.xlane.xlu0 %388
        %vm390 = vcmp.eq.f32.partialorder %v387, %v389
        %v391 = vsel %vm390, %v386, inf
        %392 = vmin.xlane.f32.xlu0 %v391
        %v393 = vpop.xlane.xlu0 %392
        %v394 = vcvt.f32.s32 %v393
        %v395 = vcvt.f32.s32 %v389
        %v396 = vshll.u32 %v395, 16
        %v397 = vadd.s32 %v396, %v394
        %v398 = vsel %vm171, %v366, 2147483647
        %v399 = vand.u32 %v398, 65535
        %v400 = vshra.s32 %v398, 16
        %v401 = vcvt.s32.f32 %v399
        %v402 = vcvt.s32.f32 %v400
        %403 = vmin.xlane.f32.xlu0 %v402
        %v404 = vpop.xlane.xlu0 %403
        %vm405 = vcmp.eq.f32.partialorder %v402, %v404
        %v406 = vsel %vm405, %v401, inf
        %407 = vmin.xlane.f32.xlu0 %v406
        %v408 = vpop.xlane.xlu0 %407
        %v409 = vcvt.f32.s32 %v408
        %v410 = vcvt.f32.s32 %v404
        %v411 = vshll.u32 %v410, 16
        %v412 = vadd.s32 %v411, %v409
        %v413 = vsel %vm171, %v367, 2147483647
        %v414 = vand.u32 %v413, 65535
        %v415 = vshra.s32 %v413, 16
        %v416 = vcvt.s32.f32 %v414
        %v417 = vcvt.s32.f32 %v415
        %418 = vmin.xlane.f32.xlu0 %v417
        %v419 = vpop.xlane.xlu0 %418
        %vm420 = vcmp.eq.f32.partialorder %v417, %v419
        %v421 = vsel %vm420, %v416, inf
        %422 = vmin.xlane.f32.xlu0 %v421
        %v423 = vpop.xlane.xlu0 %422
        %v424 = vcvt.f32.s32 %v423
        %v425 = vcvt.f32.s32 %v419
        %v426 = vshll.u32 %v425, 16
        %v427 = vadd.s32 %v426, %v424
        %vm428 = vcmp.eq.s32.totalorder %v162, %v382
        %vm429 = vcmp.eq.s32.totalorder %v162, %v397
        %vm430 = vcmp.eq.s32.totalorder %v162, %v412
        %vm431 = vcmp.eq.s32.totalorder %v162, %v427
        %v432 = vsel %vm428, -inf, %v344
        %v433 = vsel %vm429, -inf, %v345
        %v434 = vsel %vm430, -inf, %v346
        %v435 = vsel %vm431, -inf, %v347
        %v436 = vsel %vm171, %v432, -inf
        %437 = vmax.xlane.f32.xlu0 %v436
        %v438 = vpop.xlane.xlu0 %437
        %v439 = vsel %vm171, %v433, -inf
        %440 = vmax.xlane.f32.xlu0 %v439
        %v441 = vpop.xlane.xlu0 %440
        %v442 = vsel %vm171, %v434, -inf
        %443 = vmax.xlane.f32.xlu0 %v442
        %v444 = vpop.xlane.xlu0 %443
        %v445 = vsel %vm171, %v435, -inf
        %446 = vmax.xlane.f32.xlu0 %v445
        %v447 = vpop.xlane.xlu0 %446
        %vm448 = vcmp.eq.f32.partialorder %v432, %v438
        %vm449 = vcmp.eq.f32.partialorder %v433, %v441
        %vm450 = vcmp.eq.f32.partialorder %v434, %v444
        %vm451 = vcmp.eq.f32.partialorder %v435, %v447
        %v452 = vsel %vm448, %v162, 16
        %v453 = vsel %vm449, %v162, 16
        %v454 = vsel %vm450, %v162, 16
        %v455 = vsel %vm451, %v162, 16
        %v456 = vsel %vm171, %v452, 2147483647
        %v457 = vand.u32 %v456, 65535
        %v458 = vshra.s32 %v456, 16
        %v459 = vcvt.s32.f32 %v457
        %v460 = vcvt.s32.f32 %v458
        %461 = vmin.xlane.f32.xlu0 %v460
        %v462 = vpop.xlane.xlu0 %461
        %vm463 = vcmp.eq.f32.partialorder %v460, %v462
        %v464 = vsel %vm463, %v459, inf
        %465 = vmin.xlane.f32.xlu0 %v464
        %v466 = vpop.xlane.xlu0 %465
        %v467 = vcvt.f32.s32 %v466
        %v468 = vcvt.f32.s32 %v462
        %v469 = vshll.u32 %v468, 16
        %v470 = vadd.s32 %v469, %v467
        %v471 = vsel %vm171, %v453, 2147483647
        %v472 = vand.u32 %v471, 65535
        %v473 = vshra.s32 %v471, 16
        %v474 = vcvt.s32.f32 %v472
        %v475 = vcvt.s32.f32 %v473
        %476 = vmin.xlane.f32.xlu0 %v475
        %v477 = vpop.xlane.xlu0 %476
        %vm478 = vcmp.eq.f32.partialorder %v475, %v477
        %v479 = vsel %vm478, %v474, inf
        %480 = vmin.xlane.f32.xlu0 %v479
        %v481 = vpop.xlane.xlu0 %480
        %v482 = vcvt.f32.s32 %v481
        %v483 = vcvt.f32.s32 %v477
        %v484 = vshll.u32 %v483, 16
        %v485 = vadd.s32 %v484, %v482
        %v486 = vsel %vm171, %v454, 2147483647
        %v487 = vand.u32 %v486, 65535
        %v488 = vshra.s32 %v486, 16
        %v489 = vcvt.s32.f32 %v487
        %v490 = vcvt.s32.f32 %v488
        %491 = vmin.xlane.f32.xlu0 %v490
        %v492 = vpop.xlane.xlu0 %491
        %vm493 = vcmp.eq.f32.partialorder %v490, %v492
        %v494 = vsel %vm493, %v489, inf
        %495 = vmin.xlane.f32.xlu0 %v494
        %v496 = vpop.xlane.xlu0 %495
        %v497 = vcvt.f32.s32 %v496
        %v498 = vcvt.f32.s32 %v492
        %v499 = vshll.u32 %v498, 16
        %v500 = vadd.s32 %v499, %v497
        %v501 = vsel %vm171, %v455, 2147483647
        %v502 = vand.u32 %v501, 65535
        %v503 = vshra.s32 %v501, 16
        %v504 = vcvt.s32.f32 %v502
        %v505 = vcvt.s32.f32 %v503
        %506 = vmin.xlane.f32.xlu0 %v505
        %v507 = vpop.xlane.xlu0 %506
        %vm508 = vcmp.eq.f32.partialorder %v505, %v507
        %v509 = vsel %vm508, %v504, inf
        %510 = vmin.xlane.f32.xlu0 %v509
        %v511 = vpop.xlane.xlu0 %510
        %v512 = vcvt.f32.s32 %v511
        %v513 = vcvt.f32.s32 %v507
        %v514 = vshll.u32 %v513, 16
        %v515 = vadd.s32 %v514, %v512
        %vm516 = vcmp.eq.s32.totalorder %v162, %v470
        %vm517 = vcmp.eq.s32.totalorder %v162, %v485
        %vm518 = vcmp.eq.s32.totalorder %v162, %v500
        %vm519 = vcmp.eq.s32.totalorder %v162, %v515
        %v520 = vsel %vm516, -inf, %v432
        %v521 = vsel %vm517, -inf, %v433
        %v522 = vsel %vm518, -inf, %v434
        %v523 = vsel %vm519, -inf, %v435
        %v524 = vsel %vm171, %v520, -inf
        %525 = vmax.xlane.f32.xlu0 %v524
        %v526 = vpop.xlane.xlu0 %525
        %v527 = vsel %vm171, %v521, -inf
        %528 = vmax.xlane.f32.xlu0 %v527
        %v529 = vpop.xlane.xlu0 %528
        %v530 = vsel %vm171, %v522, -inf
        %531 = vmax.xlane.f32.xlu0 %v530
        %v532 = vpop.xlane.xlu0 %531
        %v533 = vsel %vm171, %v523, -inf
        %534 = vmax.xlane.f32.xlu0 %v533
        %v535 = vpop.xlane.xlu0 %534
        %vm536 = vcmp.eq.f32.partialorder %v520, %v526
        %vm537 = vcmp.eq.f32.partialorder %v521, %v529
        %vm538 = vcmp.eq.f32.partialorder %v522, %v532
        %vm539 = vcmp.eq.f32.partialorder %v523, %v535
        %v540 = vsel %vm536, %v162, 16
        %v541 = vsel %vm537, %v162, 16
        %v542 = vsel %vm538, %v162, 16
        %v543 = vsel %vm539, %v162, 16
        %v544 = vsel %vm171, %v540, 2147483647
        %v545 = vand.u32 %v544, 65535
        %v546 = vshra.s32 %v544, 16
        %v547 = vcvt.s32.f32 %v545
        %v548 = vcvt.s32.f32 %v546
        %549 = vmin.xlane.f32.xlu0 %v548
        %v550 = vpop.xlane.xlu0 %549
        %vm551 = vcmp.eq.f32.partialorder %v548, %v550
        %v552 = vsel %vm551, %v547, inf
        %553 = vmin.xlane.f32.xlu0 %v552
        %v554 = vpop.xlane.xlu0 %553
        %v555 = vcvt.f32.s32 %v554
        %v556 = vcvt.f32.s32 %v550
        %v557 = vshll.u32 %v556, 16
        %v558 = vadd.s32 %v557, %v555
        %v559 = vsel %vm171, %v541, 2147483647
        %v560 = vand.u32 %v559, 65535
        %v561 = vshra.s32 %v559, 16
        %v562 = vcvt.s32.f32 %v560
        %v563 = vcvt.s32.f32 %v561
        %564 = vmin.xlane.f32.xlu0 %v563
        %v565 = vpop.xlane.xlu0 %564
        %vm566 = vcmp.eq.f32.partialorder %v563, %v565
        %v567 = vsel %vm566, %v562, inf
        %568 = vmin.xlane.f32.xlu0 %v567
        %v569 = vpop.xlane.xlu0 %568
        %v570 = vcvt.f32.s32 %v569
        %v571 = vcvt.f32.s32 %v565
        %v572 = vshll.u32 %v571, 16
        %v573 = vadd.s32 %v572, %v570
        %v574 = vsel %vm171, %v542, 2147483647
        %v575 = vand.u32 %v574, 65535
        %v576 = vshra.s32 %v574, 16
        %v577 = vcvt.s32.f32 %v575
        %v578 = vcvt.s32.f32 %v576
        %579 = vmin.xlane.f32.xlu0 %v578
        %v580 = vpop.xlane.xlu0 %579
        %vm581 = vcmp.eq.f32.partialorder %v578, %v580
        %v582 = vsel %vm581, %v577, inf
        %583 = vmin.xlane.f32.xlu0 %v582
        %v584 = vpop.xlane.xlu0 %583
        %v585 = vcvt.f32.s32 %v584
        %v586 = vcvt.f32.s32 %v580
        %v587 = vshll.u32 %v586, 16
        %v588 = vadd.s32 %v587, %v585
        %v589 = vsel %vm171, %v543, 2147483647
        %v590 = vand.u32 %v589, 65535
        %v591 = vshra.s32 %v589, 16
        %v592 = vcvt.s32.f32 %v590
        %v593 = vcvt.s32.f32 %v591
        %594 = vmin.xlane.f32.xlu0 %v593
        %v595 = vpop.xlane.xlu0 %594
        %vm596 = vcmp.eq.f32.partialorder %v593, %v595
        %v597 = vsel %vm596, %v592, inf
        %598 = vmin.xlane.f32.xlu0 %v597
        %v599 = vpop.xlane.xlu0 %598
        %v600 = vcvt.f32.s32 %v599
        %v601 = vcvt.f32.s32 %v595
        %v602 = vshll.u32 %v601, 16
        %v603 = vadd.s32 %v602, %v600
        %vm604 = vcmask 7168
        %v605 = vsel %vm604, %v174, %v262
        %v606 = vsel %vm604, %v177, %v265
        %v607 = vsel %vm604, %v180, %v268
        %v608 = vsel %vm604, %v183, %v271
        %vm609 = vcmask 15360
        %v610 = vsel %vm609, %v605, %v350
        %v611 = vsel %vm609, %v606, %v353
        %v612 = vsel %vm609, %v607, %v356
        %v613 = vsel %vm609, %v608, %v359
        %vm614 = vcmask 23552
        %v615 = vsel %vm614, %v610, %v438
        %v616 = vsel %vm614, %v611, %v441
        %v617 = vsel %vm614, %v612, %v444
        %v618 = vsel %vm614, %v613, %v447
        %vm619 = vcmask 31744
        %v620 = vsel %vm619, %v615, %v526
        %v621 = vsel %vm619, %v616, %v529
        %v622 = vsel %vm619, %v617, %v532
        %v623 = vsel %vm619, %v618, %v535
        %vm624 = vcmask 39936
        %v625 = vsel %vm624, %v620, 0.0
        %v626 = vsel %vm624, %v621, 0.0
        %v627 = vsel %vm624, %v622, 0.0
        %v628 = vsel %vm624, %v623, 0.0
        %629 = vst [vmem:[%s141] sm:$0xff] %v625
        %630 = vst [vmem:[%s141 + $0x8] sm:$0xff] %v626
        %631 = vst [vmem:[%s141 + $0x10] sm:$0xff] %v627
        %632 = vst [vmem:[%s141 + $0x18] sm:$0xff] %v628
        %v633 = vsel %vm604, %v206, %v294
        %v634 = vsel %vm604, %v221, %v309
        %v635 = vsel %vm604, %v236, %v324
        %v636 = vsel %vm604, %v251, %v339
        %v637 = vsel %vm609, %v633, %v382
        %v638 = vsel %vm609, %v634, %v397
        %v639 = vsel %vm609, %v635, %v412
        %v640 = vsel %vm609, %v636, %v427
        %v641 = vsel %vm614, %v637, %v470
        %v642 = vsel %vm614, %v638, %v485
        %v643 = vsel %vm614, %v639, %v500
        %v644 = vsel %vm614, %v640, %v515
        %v645 = vsel %vm619, %v641, %v558
        %v646 = vsel %vm619, %v642, %v573
        %v647 = vsel %vm619, %v643, %v588
        %v648 = vsel %vm619, %v644, %v603
        %v649 = vsel %vm624, %v645, 0
        %v650 = vsel %vm624, %v646, 0
        %v651 = vsel %vm624, %v647, 0
        %v652 = vsel %vm624, %v648, 0
        %653 = vst [vmem:[%s148] sm:$0xff] %v649
        %654 = vst [vmem:[%s148 + $0x8] sm:$0xff] %v650
        %655 = vst [vmem:[%s148 + $0x10] sm:$0xff] %v651
        %656 = vst [vmem:[%s148 + $0x18] sm:$0xff] %v652
        %s657 = sand.u32 %s54, 1
        %s658 = scalar_lea.sflag [#allocation3], %s657
        %s659 = sand.u32 %s54, 1
        %s660 = smul.addr %s659, 32
        %s661 = scalar_lea.vmem [#allocation2], %s660
        %s662 = sand.u32 %s80, 1
        %s663 = scalar_lea.sflag [#allocation5], %s662
        %s664 = sand.u32 %s80, 1
        %s665 = smul.addr %s664, 32
        %s666 = scalar_lea.vmem [#allocation4], %s665
        // Predicated region
        $region25: #{tpu_custom_call.1} parent=23 // pred_check
          %p667 = pneg %p64
        $region26: #{tpu_custom_call.1} parent=23 // pred_check_branch
          %669 = sbr.rel (%p667) target = $region28
        $region27: #{tpu_custom_call.1} parent=23 // pred_region
          %s670 = smul.u32 4, %s20
          %s672 = ssub.s32 512, 512
          %673 = vsyncadd %s658, %s672
          %s674 = smul.addr %s670, 128
          %s675 = scalar_lea.hbm %s1, %s674
          %s676 = sshll.u32 %s661, 4
          %s677 = int_to_ptr.vmem [resolvable:$true] %s676
          %682 = dma.vmem_to_hbm [thread:$0]  %s677, 512, %s675, %s658, 128, 128, 8
        $region28: #{tpu_custom_call.1} parent=23 // pred_fallthru
          _
        // Predicated region
        $region29: #{tpu_custom_call.1} parent=23 // pred_check
          %p683 = pneg %p90
        $region30: #{tpu_custom_call.1} parent=23 // pred_check_branch
          %685 = sbr.rel (%p683) target = $region32
        $region31: #{tpu_custom_call.1} parent=23 // pred_region
          %s686 = smul.u32 4, %s20
          %s688 = ssub.s32 512, 512
          %689 = vsyncadd %s663, %s688
          %s690 = smul.addr %s686, 128
          %s691 = scalar_lea.hbm %s2, %s690
          %s692 = sshll.u32 %s666, 4
          %s693 = int_to_ptr.vmem [resolvable:$true] %s692
          %698 = dma.vmem_to_hbm [thread:$0]  %s693, 512, %s691, %s663, 128, 128, 8
        $region32: #{tpu_custom_call.1} parent=23 // pred_fallthru
          _
      $region24: #{tpu_custom_call.1} parent=5 // pred_fallthru
        _
      %p699 = scmp.le.s32.totalorder 2, %s15
      // Predicated region
      $region33: #{tpu_custom_call.1} parent=5 // pred_check
        %p700 = pneg %p699
      $region34: #{tpu_custom_call.1} parent=5 // pred_check_branch
        %702 = sbr.rel (%p700) target = $region36
      $region35: #{tpu_custom_call.1} parent=5 // pred_region
        %s703 = ssub.s32 %s15, 2
        // Predicated region
        $region37: #{tpu_custom_call.1} parent=35 // pred_check
          %p704 = pneg %p70
        $region38: #{tpu_custom_call.1} parent=35 // pred_check_branch
          %706 = sbr.rel (%p704) target = $region40
        $region39: #{tpu_custom_call.1} parent=35 // pred_region
          %s707 = sand.u32 %s55, 1
          %s708 = scalar_lea.sflag [#allocation3], %s707
          %s709 = sand.u32 %s55, 1
          %s710 = smul.addr %s709, 32
          %s711 = scalar_lea.vmem [#allocation2], %s710
          %712 = dma.done %s708, 512
        $region40: #{tpu_custom_call.1} parent=35 // pred_fallthru
          _
        // Predicated region
        $region41: #{tpu_custom_call.1} parent=35 // pred_check
          %p713 = pneg %p96
        $region42: #{tpu_custom_call.1} parent=35 // pred_check_branch
          %715 = sbr.rel (%p713) target = $region44
        $region43: #{tpu_custom_call.1} parent=35 // pred_region
          %s716 = sand.u32 %s81, 1
          %s717 = scalar_lea.sflag [#allocation5], %s716
          %s718 = sand.u32 %s81, 1
          %s719 = smul.addr %s718, 32
          %s720 = scalar_lea.vmem [#allocation4], %s719
          %721 = dma.done %s717, 512
        $region44: #{tpu_custom_call.1} parent=35 // pred_fallthru
          _
      $region36: #{tpu_custom_call.1} parent=5 // pred_fallthru
        _
    $region6: #{tpu_custom_call.1} parent=1 // loop_footer
      %s19 = sadd.s32 1, %s15
    $region7: #{tpu_custom_call.1} parent=1 // loop_footer_branch
      %14 = sbr.rel target = $region3
    $region8: #{tpu_custom_call.1} parent=1 // loop_exit
      _
    %722 = vsyncpa [#allocation3], 1
    %s723 = scalar_lea.sflag [#allocation3], 1
    %724 = vsyncpa %s723, 1
    %725 = vsyncpa [#allocation5], 1
    %s726 = scalar_lea.sflag [#allocation5], 1
    %727 = vsyncpa %s726, 1

</llo_original>
